<compile_context>
chip_gen: v5e
topology: v5e:2x2
jax: 0.10.0
libtpu: 0.0.40
codegen_flags: <defaults>
</compile_context>

<pallas_src>
import jax
import jax.numpy as jnp
from jax.experimental import pallas as pl
from jax.experimental.pallas import tpu as pltpu


# ----------------------------------------------------------------------------
# Fused kernel: the whole Assign_layer forward in one pallas_call
# ----------------------------------------------------------------------------
def _assign_layer_kernel(adjg_ref, adj_ref, x_ref,
                         wemb_ref, bemb_ref,
                         wass_ref, bass_ref,
                         watt_ref, batt_ref,
                         s_ref, xc_ref, gh_ref, ah_ref):
    f32 = jnp.float32
    neg_slope = jnp.float32(0.01)

    adj_g = adjg_ref[...]                       # (N_src, N_dst) graph adjacency
    edge = adj_g != 0.0                         # edge mask, computed ONCE, reused 3x
    m = edge.astype(f32)
    x = x_ref[...]                              # (N, E)

    # ---- GCN_emb: linear (untransposed W on the MXU) -> mean over in-edges -> ReLU
    h_emb = jax.lax.dot_general(x, wemb_ref[...], (((1,), (1,)), ((), ())),
                                preferred_element_type=f32) + bemb_ref[...]   # (N, E)
    deg_in = jnp.sum(m, axis=0, keepdims=True)                  # (1, N_dst)  XLU reduce
    m_mean = m * jnp.where(deg_in > 0.0, 1.0 / deg_in, 0.0)     # fold 1/deg into the mask
    z = jax.lax.dot_general(m_mean, h_emb, (((0,), (0,)), ((), ())),
                            preferred_element_type=f32)          # m_mean.T @ h_emb (N, E)
    z = jnp.maximum(z, 0.0)

    # ---- GCN_ass: linear -> per-dst softmax over incoming edges (GAT-style) -> ReLU
    h_ass = jax.lax.dot_general(z, wass_ref[...], (((1,), (1,)), ((), ())),
                                preferred_element_type=f32) + bass_ref[...]   # (N, C)
    c = h_ass.shape[1]
    watt = watt_ref[...]                                          # (1, 2C)
    w_src = watt[:, :c]                                           # (1, C)
    w_dst = watt[:, c:]                                           # (1, C)
    src_col = jax.lax.dot_general(h_ass, w_src, (((1,), (1,)), ((), ())),
                                  preferred_element_type=f32)     # (N_src, 1)
    dst_row = jax.lax.dot_general(w_dst, h_ass, (((1,), (1,)), ((), ())),
                                  preferred_element_type=f32)     # (1, N_dst)
    scores = src_col + dst_row + batt_ref[...]                    # (N_src, N_dst)
    scores = jnp.where(scores >= 0.0, scores, neg_slope * scores) # leaky_relu(0.01)
    masked = jnp.where(edge, scores, jnp.float32(-1e30))
    mx = jnp.max(masked, axis=0, keepdims=True)                   # (1, N_dst)
    ex = jnp.where(edge, jnp.exp(masked - mx), 0.0)
    den = jnp.sum(ex, axis=0, keepdims=True)
    alpha = ex * jnp.where(den > 0.0, 1.0 / den, 0.0)             # (N_src, N_dst)
    s_pre = jax.lax.dot_general(alpha, h_ass, (((0,), (0,)), ((), ())),
                                preferred_element_type=f32)       # alpha.T @ h_ass (N, C)
    s_pre = jnp.maximum(s_pre, 0.0)

    # ---- s = softmax(s_pre, dim=-1)   (row softmax on the lane axis)
    smx = jnp.max(s_pre, axis=-1, keepdims=True)
    sex = jnp.exp(s_pre - smx)
    s = sex / jnp.sum(sex, axis=-1, keepdims=True)                # (N, C)

    # ---- coarse features and coarse adjacency — never leave VMEM until final store
    xc = jax.lax.dot_general(s, z, (((0,), (0,)), ((), ())),
                             preferred_element_type=f32)          # s.T @ z      (C, E)
    sta = jax.lax.dot_general(s, adj_ref[...], (((0,), (0,)), ((), ())),
                              preferred_element_type=f32)         # s.T @ adj    (C, N)
    adj_s = jnp.dot(sta, s, preferred_element_type=f32)           # (C, C)
    rows = jax.lax.broadcasted_iota(jnp.int32, adj_s.shape, 0)
    cols = jax.lax.broadcasted_iota(jnp.int32, adj_s.shape, 1)
    diag = rows == cols
    adj_h = jnp.where(diag, 0.0, adj_s)                           # setdiag(0)
    # TODO(synk): dgl.from_scipy + add_self_loop returns a graph object; we return
    #             its dense connectivity (nonzero mask with self-loops) instead.
    gh = jnp.where(diag, 1.0, (adj_h != 0.0).astype(f32))

    # Outputs (last dims 4/16 -> masked partial stores; negligible at toy size.
    # At production scale these would be packed into one 128-lane-dense slab.)
    s_ref[...] = s
    xc_ref[...] = xc
    gh_ref[...] = gh
    ah_ref[...] = adj_h


# ----------------------------------------------------------------------------
# Wrapper: one pallas_call, whole-array VMEM blocks
# ----------------------------------------------------------------------------
@jax.jit
def assign_layer_forward(adj_graph, adj, x, params):
    n, e = x.shape
    c = params["ass_w"].shape[0]
    vmem = pl.BlockSpec(memory_space=pltpu.MemorySpace.VMEM)
    out_shape = (
        jax.ShapeDtypeStruct((n, c), jnp.float32),   # s
        jax.ShapeDtypeStruct((c, e), jnp.float32),   # x' = s.T @ z
        jax.ShapeDtypeStruct((c, c), jnp.float32),   # graph_higher connectivity (+ self loops)
        jax.ShapeDtypeStruct((c, c), jnp.float32),   # adj_higher = s.T @ adj @ s, zero diag
    )
    return pl.pallas_call(
        _assign_layer_kernel,
        out_shape=out_shape,
        in_specs=[vmem] * 9,
        out_specs=(vmem, vmem, vmem, vmem),
    )(adj_graph, adj, x,
      params["emb_w"], params["emb_b"].reshape(1, -1),   # reshape = free bitcast
      params["ass_w"], params["ass_b"].reshape(1, -1),
      params["att_w"], params["att_b"].reshape(1, 1))


# ----------------------------------------------------------------------------
# Pure-JAX reference (same math) for a correctness self-check
# ----------------------------------------------------------------------------
def assign_layer_reference(adj_graph, adj, x, p):
    f32 = jnp.float32
    edge = adj_graph != 0.0
    m = edge.astype(f32)
    h_emb = x @ p["emb_w"].T + p["emb_b"]
    deg = jnp.sum(m, axis=0, keepdims=True)
    m_mean = m * jnp.where(deg > 0.0, 1.0 / deg, 0.0)
    z = jnp.maximum(m_mean.T @ h_emb, 0.0)
    h_ass = z @ p["ass_w"].T + p["ass_b"]
    c = h_ass.shape[1]
    w_src, w_dst = p["att_w"][:, :c], p["att_w"][:, c:]
    scores = h_ass @ w_src.T + (h_ass @ w_dst.T).T + p["att_b"]
    scores = jnp.where(scores >= 0.0, scores, 0.01 * scores)
    masked = jnp.where(edge, scores, -1e30)
    mx = jnp.max(masked, axis=0, keepdims=True)
    ex = jnp.where(edge, jnp.exp(masked - mx), 0.0)
    den = jnp.sum(ex, axis=0, keepdims=True)
    alpha = ex * jnp.where(den > 0.0, 1.0 / den, 0.0)
    s_pre = jnp.maximum(alpha.T @ h_ass, 0.0)
    s = jax.nn.softmax(s_pre, axis=-1)
    xc = s.T @ z
    adj_s = s.T @ adj @ s
    dg = jnp.eye(adj_s.shape[0], dtype=bool)
    adj_h = jnp.where(dg, 0.0, adj_s)
    gh = jnp.where(dg, 1.0, (adj_h != 0.0).astype(f32))
    return s, xc, gh, adj_h


if __name__ == "__main__":
    key = jax.random.PRNGKey(0)
    k_adj, k_x, *kp = jax.random.split(key, 9)

    N, E, C = 16, 16, 4          # nodes, embed_dim, num_cluster

    # symmetric binary graph adjacency with self-loops (every node has in-edges)
    a = (jax.random.uniform(k_adj, (N, N)) < 0.25).astype(jnp.float32)
    adj_graph = jnp.clip(a + a.T + jnp.eye(N, dtype=jnp.float32), 0.0, 1.0)
    adj = adj_graph              # weighted adjacency fed to update_graph_and_adj
    x = jax.random.normal(k_x, (N, E), jnp.float32)

    sc = 0.2
    params = {
        "emb_w": sc * jax.random.normal(kp[0], (E, E), jnp.float32),
        "emb_b": sc * jax.random.normal(kp[1], (E,), jnp.float32),
        "ass_w": sc * jax.random.normal(kp[2], (C, E), jnp.float32),
        "ass_b": sc * jax.random.normal(kp[3], (C,), jnp.float32),
        "att_w": sc * jax.random.normal(kp[4], (1, 2 * C), jnp.float32),
        "att_b": sc * jax.random.normal(kp[5], (1,), jnp.float32),
    }

    s, xc, gh, ah = assign_layer_forward(adj_graph, adj, x, params)
    jax.block_until_ready((s, xc, gh, ah))

    s_r, xc_r, gh_r, ah_r = assign_layer_reference(adj_graph, adj, x, params)
    for got, ref in ((s, s_r), (xc, xc_r), (gh, gh_r), (ah, ah_r)):
        err = float(jnp.max(jnp.abs(got - ref)))
        assert jnp.allclose(got, ref, rtol=2e-2, atol=2e-2), f"max abs err {err}"

    print("KERNEL_OK")
</pallas_src>

<mosaic_0001>
module attributes {stable_mosaic.version = 11 : i64} {
  func.func @_assign_layer_kernel(%arg0: memref<16x16xf32, #tpu.memory_space<vmem>>, %arg1: memref<16x16xf32, #tpu.memory_space<vmem>>, %arg2: memref<16x16xf32, #tpu.memory_space<vmem>>, %arg3: memref<16x16xf32, #tpu.memory_space<vmem>>, %arg4: memref<1x16xf32, #tpu.memory_space<vmem>>, %arg5: memref<4x16xf32, #tpu.memory_space<vmem>>, %arg6: memref<1x4xf32, #tpu.memory_space<vmem>>, %arg7: memref<1x8xf32, #tpu.memory_space<vmem>>, %arg8: memref<1x1xf32, #tpu.memory_space<vmem>>, %arg9: memref<16x4xf32, #tpu.memory_space<vmem>>, %arg10: memref<4x16xf32, #tpu.memory_space<vmem>>, %arg11: memref<4x4xf32, #tpu.memory_space<vmem>>, %arg12: memref<4x4xf32, #tpu.memory_space<vmem>>) attributes {dimension_semantics = [], scalar_prefetch = 0 : i64, scratch_operands = 0 : i64, tpu.core_type = #tpu.core_type<tc>} {
    %c0 = arith.constant 0 : index
    %c0_0 = arith.constant 0 : index
    %0 = vector.load %arg0[%c0, %c0_0] : memref<16x16xf32, #tpu.memory_space<vmem>>, vector<16x16xf32>
    %cst = arith.constant 0.000000e+00 : f32
    %1 = vector.broadcast %cst : f32 to vector<16x16xf32>
    %2 = arith.cmpf one, %0, %1 : vector<16x16xf32>
    %3 = arith.extui %2 : vector<16x16xi1> to vector<16x16xi32>
    %4 = arith.sitofp %3 : vector<16x16xi32> to vector<16x16xf32>
    %c0_1 = arith.constant 0 : index
    %c0_2 = arith.constant 0 : index
    %5 = vector.load %arg2[%c0_1, %c0_2] : memref<16x16xf32, #tpu.memory_space<vmem>>, vector<16x16xf32>
    %c0_3 = arith.constant 0 : index
    %c0_4 = arith.constant 0 : index
    %6 = vector.load %arg3[%c0_3, %c0_4] : memref<16x16xf32, #tpu.memory_space<vmem>>, vector<16x16xf32>
    %cst_5 = arith.constant dense<0.000000e+00> : vector<16x16xf32>
    %7 = tpu.matmul %5, %6, %cst_5 {dimension_numbers = #tpu.dot_dimension_numbers<[1], [1], [0], [0], [0, 0, 1, 0], [], []>} : vector<16x16xf32>, vector<16x16xf32>, vector<16x16xf32> -> vector<16x16xf32>
    %c0_6 = arith.constant 0 : index
    %c0_7 = arith.constant 0 : index
    %8 = vector.load %arg4[%c0_6, %c0_7] : memref<1x16xf32, #tpu.memory_space<vmem>>, vector<1x16xf32>
    %9 = vector.broadcast %8 : vector<1x16xf32> to vector<16x16xf32>
    %10 = arith.addf %7, %9 : vector<16x16xf32>
    %cst_8 = arith.constant dense<0.000000e+00> : vector<16xf32>
    %11 = vector.multi_reduction <add>, %4, %cst_8 [0] : vector<16x16xf32> to vector<16xf32>
    %12 = vector.shape_cast %11 : vector<16xf32> to vector<1x16xf32>
    %cst_9 = arith.constant 0.000000e+00 : f32
    %13 = vector.broadcast %cst_9 : f32 to vector<1x16xf32>
    %14 = arith.cmpf ogt, %12, %13 : vector<1x16xf32>
    %cst_10 = arith.constant 1.000000e+00 : f32
    %15 = vector.broadcast %cst_10 : f32 to vector<1x16xf32>
    %16 = arith.divf %15, %12 : vector<1x16xf32>
    %cst_11 = arith.constant 0.000000e+00 : f32
    %17 = vector.broadcast %cst_11 : f32 to vector<1x16xf32>
    %18 = arith.select %14, %16, %17 : vector<1x16xi1>, vector<1x16xf32>
    %19 = vector.broadcast %18 : vector<1x16xf32> to vector<16x16xf32>
    %20 = arith.mulf %4, %19 : vector<16x16xf32>
    %cst_12 = arith.constant dense<0.000000e+00> : vector<16x16xf32>
    %21 = tpu.matmul %20, %10, %cst_12 {dimension_numbers = #tpu.dot_dimension_numbers<[0], [0], [1], [1], [0, 1, 1, 1], [], []>} : vector<16x16xf32>, vector<16x16xf32>, vector<16x16xf32> -> vector<16x16xf32>
    %cst_13 = arith.constant 0.000000e+00 : f32
    %22 = vector.broadcast %cst_13 : f32 to vector<16x16xf32>
    %23 = arith.maximumf %21, %22 : vector<16x16xf32>
    %c0_14 = arith.constant 0 : index
    %c0_15 = arith.constant 0 : index
    %24 = vector.load %arg5[%c0_14, %c0_15] : memref<4x16xf32, #tpu.memory_space<vmem>>, vector<4x16xf32>
    %cst_16 = arith.constant dense<0.000000e+00> : vector<16x4xf32>
    %25 = tpu.matmul %23, %24, %cst_16 {dimension_numbers = #tpu.dot_dimension_numbers<[1], [1], [0], [0], [0, 0, 1, 0], [], []>} : vector<16x16xf32>, vector<4x16xf32>, vector<16x4xf32> -> vector<16x4xf32>
    %c0_17 = arith.constant 0 : index
    %c0_18 = arith.constant 0 : index
    %26 = vector.load %arg6[%c0_17, %c0_18] : memref<1x4xf32, #tpu.memory_space<vmem>>, vector<1x4xf32>
    %27 = vector.broadcast %26 : vector<1x4xf32> to vector<16x4xf32>
    %28 = arith.addf %25, %27 : vector<16x4xf32>
    %c0_19 = arith.constant 0 : index
    %c0_20 = arith.constant 0 : index
    %29 = vector.load %arg7[%c0_19, %c0_20] : memref<1x8xf32, #tpu.memory_space<vmem>>, vector<1x8xf32>
    %30 = vector.extract_strided_slice %29 {offsets = [0, 0], sizes = [1, 4], strides = [1, 1]} : vector<1x8xf32> to vector<1x4xf32>
    %31 = vector.extract_strided_slice %29 {offsets = [0, 4], sizes = [1, 4], strides = [1, 1]} : vector<1x8xf32> to vector<1x4xf32>
    %cst_21 = arith.constant dense<0.000000e+00> : vector<16x1xf32>
    %32 = tpu.matmul %28, %30, %cst_21 {dimension_numbers = #tpu.dot_dimension_numbers<[1], [1], [0], [0], [0, 0, 1, 0], [], []>} : vector<16x4xf32>, vector<1x4xf32>, vector<16x1xf32> -> vector<16x1xf32>
    %cst_22 = arith.constant dense<0.000000e+00> : vector<1x16xf32>
    %33 = tpu.matmul %31, %28, %cst_22 {dimension_numbers = #tpu.dot_dimension_numbers<[1], [1], [0], [0], [0, 0, 1, 0], [], []>} : vector<1x4xf32>, vector<16x4xf32>, vector<1x16xf32> -> vector<1x16xf32>
    %34 = vector.broadcast %32 : vector<16x1xf32> to vector<16x16xf32>
    %35 = vector.broadcast %33 : vector<1x16xf32> to vector<16x16xf32>
    %36 = arith.addf %34, %35 : vector<16x16xf32>
    %c0_23 = arith.constant 0 : index
    %c0_24 = arith.constant 0 : index
    %37 = vector.load %arg8[%c0_23, %c0_24] : memref<1x1xf32, #tpu.memory_space<vmem>>, vector<1x1xf32>
    %38 = vector.broadcast %37 : vector<1x1xf32> to vector<16x16xf32>
    %39 = arith.addf %36, %38 : vector<16x16xf32>
    %cst_25 = arith.constant 0.000000e+00 : f32
    %40 = vector.broadcast %cst_25 : f32 to vector<16x16xf32>
    %41 = arith.cmpf oge, %39, %40 : vector<16x16xf32>
    %cst_26 = arith.constant 0.00999999977 : f32
    %42 = vector.broadcast %cst_26 : f32 to vector<16x16xf32>
    %43 = arith.mulf %42, %39 : vector<16x16xf32>
    %44 = arith.select %41, %39, %43 : vector<16x16xi1>, vector<16x16xf32>
    %cst_27 = arith.constant -1.000000e+30 : f32
    %45 = vector.broadcast %cst_27 : f32 to vector<16x16xf32>
    %46 = arith.select %2, %44, %45 : vector<16x16xi1>, vector<16x16xf32>
    %cst_28 = arith.constant dense<0xFF800000> : vector<16xf32>
    %47 = vector.multi_reduction <maximumf>, %46, %cst_28 [0] : vector<16x16xf32> to vector<16xf32>
    %48 = vector.shape_cast %47 : vector<16xf32> to vector<1x16xf32>
    %49 = vector.broadcast %48 : vector<1x16xf32> to vector<16x16xf32>
    %50 = arith.subf %46, %49 : vector<16x16xf32>
    %51 = math.exp %50 : vector<16x16xf32>
    %cst_29 = arith.constant 0.000000e+00 : f32
    %52 = vector.broadcast %cst_29 : f32 to vector<16x16xf32>
    %53 = arith.select %2, %51, %52 : vector<16x16xi1>, vector<16x16xf32>
    %cst_30 = arith.constant dense<0.000000e+00> : vector<16xf32>
    %54 = vector.multi_reduction <add>, %53, %cst_30 [0] : vector<16x16xf32> to vector<16xf32>
    %55 = vector.shape_cast %54 : vector<16xf32> to vector<1x16xf32>
    %cst_31 = arith.constant 0.000000e+00 : f32
    %56 = vector.broadcast %cst_31 : f32 to vector<1x16xf32>
    %57 = arith.cmpf ogt, %55, %56 : vector<1x16xf32>
    %cst_32 = arith.constant 1.000000e+00 : f32
    %58 = vector.broadcast %cst_32 : f32 to vector<1x16xf32>
    %59 = arith.divf %58, %55 : vector<1x16xf32>
    %cst_33 = arith.constant 0.000000e+00 : f32
    %60 = vector.broadcast %cst_33 : f32 to vector<1x16xf32>
    %61 = arith.select %57, %59, %60 : vector<1x16xi1>, vector<1x16xf32>
    %62 = vector.broadcast %61 : vector<1x16xf32> to vector<16x16xf32>
    %63 = arith.mulf %53, %62 : vector<16x16xf32>
    %cst_34 = arith.constant dense<0.000000e+00> : vector<16x4xf32>
    %64 = tpu.matmul %63, %28, %cst_34 {dimension_numbers = #tpu.dot_dimension_numbers<[0], [0], [1], [1], [0, 1, 1, 1], [], []>} : vector<16x16xf32>, vector<16x4xf32>, vector<16x4xf32> -> vector<16x4xf32>
    %cst_35 = arith.constant 0.000000e+00 : f32
    %65 = vector.broadcast %cst_35 : f32 to vector<16x4xf32>
    %66 = arith.maximumf %64, %65 : vector<16x4xf32>
    %cst_36 = arith.constant dense<0xFF800000> : vector<16xf32>
    %67 = vector.multi_reduction <maximumf>, %66, %cst_36 [1] : vector<16x4xf32> to vector<16xf32>
    %68 = vector.shape_cast %67 : vector<16xf32> to vector<16x1xf32>
    %69 = vector.broadcast %68 : vector<16x1xf32> to vector<16x4xf32>
    %70 = arith.subf %66, %69 : vector<16x4xf32>
    %71 = math.exp %70 : vector<16x4xf32>
    %cst_37 = arith.constant dense<0.000000e+00> : vector<16xf32>
    %72 = vector.multi_reduction <add>, %71, %cst_37 [1] : vector<16x4xf32> to vector<16xf32>
    %73 = vector.shape_cast %72 : vector<16xf32> to vector<16x1xf32>
    %74 = vector.broadcast %73 : vector<16x1xf32> to vector<16x4xf32>
    %75 = arith.divf %71, %74 : vector<16x4xf32>
    %cst_38 = arith.constant dense<0.000000e+00> : vector<4x16xf32>
    %76 = tpu.matmul %75, %23, %cst_38 {dimension_numbers = #tpu.dot_dimension_numbers<[0], [0], [1], [1], [0, 1, 1, 1], [], []>} : vector<16x4xf32>, vector<16x16xf32>, vector<4x16xf32> -> vector<4x16xf32>
    %c0_39 = arith.constant 0 : index
    %c0_40 = arith.constant 0 : index
    %77 = vector.load %arg1[%c0_39, %c0_40] : memref<16x16xf32, #tpu.memory_space<vmem>>, vector<16x16xf32>
    %cst_41 = arith.constant dense<0.000000e+00> : vector<4x16xf32>
    %78 = tpu.matmul %75, %77, %cst_41 {dimension_numbers = #tpu.dot_dimension_numbers<[0], [0], [1], [1], [0, 1, 1, 1], [], []>} : vector<16x4xf32>, vector<16x16xf32>, vector<4x16xf32> -> vector<4x16xf32>
    %cst_42 = arith.constant dense<0.000000e+00> : vector<4x4xf32>
    %79 = tpu.matmul %78, %75, %cst_42 {dimension_numbers = #tpu.dot_dimension_numbers<[1], [0], [0], [1], [0, 0, 1, 1], [], []>} : vector<4x16xf32>, vector<16x4xf32>, vector<4x4xf32> -> vector<4x4xf32>
    %80 = tpu.iota {dimensions = array<i32: 0>} : vector<4x4xi32>
    %81 = tpu.iota {dimensions = array<i32: 1>} : vector<4x4xi32>
    %82 = arith.cmpi eq, %80, %81 : vector<4x4xi32>
    %cst_43 = arith.constant 0.000000e+00 : f32
    %83 = vector.broadcast %cst_43 : f32 to vector<4x4xf32>
    %84 = arith.select %82, %83, %79 : vector<4x4xi1>, vector<4x4xf32>
    %cst_44 = arith.constant 0.000000e+00 : f32
    %85 = vector.broadcast %cst_44 : f32 to vector<4x4xf32>
    %86 = arith.cmpf one, %84, %85 : vector<4x4xf32>
    %87 = arith.extui %86 : vector<4x4xi1> to vector<4x4xi32>
    %88 = arith.sitofp %87 : vector<4x4xi32> to vector<4x4xf32>
    %cst_45 = arith.constant 1.000000e+00 : f32
    %89 = vector.broadcast %cst_45 : f32 to vector<4x4xf32>
    %90 = arith.select %82, %89, %88 : vector<4x4xi1>, vector<4x4xf32>
    %c0_46 = arith.constant 0 : index
    %c0_47 = arith.constant 0 : index
    %91 = vector.load %arg9[%c0_46, %c0_47] : memref<16x4xf32, #tpu.memory_space<vmem>>, vector<16x4xf32>
    tpu.vector_store %arg9[%c0_46, %c0_47], %75 {strides = array<i32>} : memref<16x4xf32, #tpu.memory_space<vmem>>, vector<16x4xf32>,
    %c0_48 = arith.constant 0 : index
    %c0_49 = arith.constant 0 : index
    %92 = vector.load %arg10[%c0_48, %c0_49] : memref<4x16xf32, #tpu.memory_space<vmem>>, vector<4x16xf32>
    tpu.vector_store %arg10[%c0_48, %c0_49], %76 {strides = array<i32>} : memref<4x16xf32, #tpu.memory_space<vmem>>, vector<4x16xf32>,
    %c0_50 = arith.constant 0 : index
    %c0_51 = arith.constant 0 : index
    %93 = vector.load %arg11[%c0_50, %c0_51] : memref<4x4xf32, #tpu.memory_space<vmem>>, vector<4x4xf32>
    tpu.vector_store %arg11[%c0_50, %c0_51], %90 {strides = array<i32>} : memref<4x4xf32, #tpu.memory_space<vmem>>, vector<4x4xf32>,
    %c0_52 = arith.constant 0 : index
    %c0_53 = arith.constant 0 : index
    %94 = vector.load %arg12[%c0_52, %c0_53] : memref<4x4xf32, #tpu.memory_space<vmem>>, vector<4x4xf32>
    tpu.vector_store %arg12[%c0_52, %c0_53], %84 {strides = array<i32>} : memref<4x4xf32, #tpu.memory_space<vmem>>, vector<4x4xf32>,
    return
  }
}

</mosaic_0001>

<llo_original>
// kernel: assign_layer_forward.1
$region0: #{assign_layer_forward.1}
  #allocation0 [shape = 'u32[]', space=smem, size = 0x4, offset = 0x4, fixed_abs, tag = 'smem constant byte address 0x4 - core index']
  #allocation1 [shape = 'u32[72,128]{1,0:T(1,128)}', space=vmem, size = 0x9000, scoped, tag = 'internal scratch']
  #allocation2 [shape = 'f32[1,1]{1,0:T(1,128)S(1)}', space=vmem, size = 0x200, scoped, tag = 'scoped memory for assign_layer_forward.1']
  %s0 = inlined_call_operand.hbm [shape: f32[16,16], index: 0, kind: input, shape index: {}]
  %s1 = inlined_call_operand.hbm [shape: f32[16,16], index: 1, kind: input, shape index: {}]
  %s2 = inlined_call_operand.hbm [shape: f32[16,16], index: 2, kind: input, shape index: {}]
  %s3 = inlined_call_operand.hbm [shape: f32[16,16], index: 3, kind: input, shape index: {}]
  %s4 = inlined_call_operand.vmem [shape: f32[1,16], index: 4, kind: input, shape index: {}]
  %s5 = inlined_call_operand.vmem [shape: f32[4,16], index: 5, kind: input, shape index: {}]
  %s6 = inlined_call_operand.vmem [shape: f32[1,4], index: 6, kind: input, shape index: {}]
  %s7 = inlined_call_operand.vmem [shape: f32[1,8], index: 7, kind: input, shape index: {}]
  %s8 = inlined_call_operand.<no memory space> [shape: f32[1,1], index: 8, kind: input, shape index: {}]
  %s9 = inlined_call_operand.vmem [shape: f32[16,4], index: 9, kind: output, shape index: {0}]
  %s10 = inlined_call_operand.hbm [shape: f32[4,16], index: 10, kind: output, shape index: {1}]
  %s11 = inlined_call_operand.hbm [shape: f32[4,4], index: 11, kind: output, shape index: {2}]
  %s12 = inlined_call_operand.hbm [shape: f32[4,4], index: 12, kind: output, shape index: {3}]
  %13 = xla_tuple %s9, %s10, %s11, %s12
  %s14 = sld [smem:[#allocation0]]
  $region86: #{assign_layer_forward.1} parent=0
    _
  %s16 = ssub.s32 1, %s14
  %s17 = scalar_select 0, %s16, %s14
  %v18 = vstv %s8
  %19 = vst [vmem:[#allocation2] sm:$0x1] %v18
  $region1: #{assign_layer_forward.1} parent=0
    #allocation3 [shape = 'u8[8192]{0}', space=vmem, size = 0x2000, scoped, tag = 'input window, operand 0, single buffered']
    #allocation4 [shape = 's32[1]{0}', space=sflag, size = 0x4, scoped, tag = 'scoped memory for assign_layer_forward.1']
    #allocation5 [shape = 's32[1]{0}', space=sflag, size = 0x4, scoped, tag = 'scoped memory for assign_layer_forward.1']
    #allocation6 [shape = 'u8[8192]{0}', space=vmem, size = 0x2000, scoped, tag = 'input window, operand 1, single buffered']
    #allocation7 [shape = 's32[1]{0}', space=sflag, size = 0x4, scoped, tag = 'scoped memory for assign_layer_forward.1']
    #allocation8 [shape = 'u8[8192]{0}', space=vmem, size = 0x2000, scoped, tag = 'input window, operand 2, single buffered']
    #allocation9 [shape = 'u8[8192]{0}', space=vmem, size = 0x2000, scoped, tag = 'input window, operand 3, single buffered']
    #allocation10 [shape = 's32[1]{0}', space=sflag, size = 0x4, scoped, tag = 'scoped memory for assign_layer_forward.1']
    #allocation11 [shape = 'u8[2048]{0}', space=vmem, size = 0x800, scoped, tag = 'output window, operand 1, single buffered']
    #allocation12 [shape = 'u8[2048]{0}', space=vmem, size = 0x800, scoped, tag = 'output window, operand 2, single buffered']
    #allocation13 [shape = 's32[1]{0}', space=sflag, size = 0x4, scoped, tag = 'scoped memory for assign_layer_forward.1']
    #allocation14 [shape = 'u8[2048]{0}', space=vmem, size = 0x800, scoped, tag = 'output window, operand 3, single buffered']
    %20 = vsyncpa [#allocation4], 0
    %21 = vsyncpa [#allocation7], 0
    %22 = vsyncpa [#allocation10], 0
    %23 = vsyncpa [#allocation5], 0
    %24 = vsyncpa [#allocation13], 0
    // Predicated region
    $region2: #{assign_layer_forward.1} parent=1 // pred_check
      _
    $region3: #{assign_layer_forward.1} parent=1 // pred_check_branch
      %26 = sbr.rel (0) target = $region5
    $region4: #{assign_layer_forward.1} parent=1 // pred_region
      %28 = vsyncadd [#allocation4], 0
      %s29 = sshll.u32 %s0, 4
      %s30 = int_to_ptr.hbm [resolvable:$true] %s29
      %s31 = sshll.u32 [#allocation3], 4
      %s32 = int_to_ptr.vmem [resolvable:$true] %s31
      %37 = dma.hbm_to_vmem [thread:$0]  %s30, 256, %s32, [#allocation4], 128, 128, 8
    $region5: #{assign_layer_forward.1} parent=1 // pred_fallthru
      _
    // Predicated region
    $region6: #{assign_layer_forward.1} parent=1 // pred_check
      _
    $region7: #{assign_layer_forward.1} parent=1 // pred_check_branch
      %39 = sbr.rel (0) target = $region9
    $region8: #{assign_layer_forward.1} parent=1 // pred_region
      %41 = vsyncadd [#allocation7], 0
      %s42 = sshll.u32 %s1, 4
      %s43 = int_to_ptr.hbm [resolvable:$true] %s42
      %s44 = sshll.u32 [#allocation6], 4
      %s45 = int_to_ptr.vmem [resolvable:$true] %s44
      %50 = dma.hbm_to_vmem [thread:$0]  %s43, 256, %s45, [#allocation7], 128, 128, 8
    $region9: #{assign_layer_forward.1} parent=1 // pred_fallthru
      _
    // Predicated region
    $region10: #{assign_layer_forward.1} parent=1 // pred_check
      _
    $region11: #{assign_layer_forward.1} parent=1 // pred_check_branch
      %52 = sbr.rel (0) target = $region13
    $region12: #{assign_layer_forward.1} parent=1 // pred_region
      %54 = vsyncadd [#allocation7], 0
      %s55 = sshll.u32 %s2, 4
      %s56 = int_to_ptr.hbm [resolvable:$true] %s55
      %s57 = sshll.u32 [#allocation8], 4
      %s58 = int_to_ptr.vmem [resolvable:$true] %s57
      %63 = dma.hbm_to_vmem [thread:$0]  %s56, 256, %s58, [#allocation7], 128, 128, 8
    $region13: #{assign_layer_forward.1} parent=1 // pred_fallthru
      _
    // Predicated region
    $region14: #{assign_layer_forward.1} parent=1 // pred_check
      _
    $region15: #{assign_layer_forward.1} parent=1 // pred_check_branch
      %65 = sbr.rel (0) target = $region17
    $region16: #{assign_layer_forward.1} parent=1 // pred_region
      %67 = vsyncadd [#allocation10], 0
      %s68 = sshll.u32 %s3, 4
      %s69 = int_to_ptr.hbm [resolvable:$true] %s68
      %s70 = sshll.u32 [#allocation9], 4
      %s71 = int_to_ptr.vmem [resolvable:$true] %s70
      %76 = dma.hbm_to_vmem [thread:$0]  %s69, 256, %s71, [#allocation10], 128, 128, 8
    $region17: #{assign_layer_forward.1} parent=1 // pred_fallthru
      _
    // Predicated region
    $region18: #{assign_layer_forward.1} parent=1 // pred_check
      _
    $region19: #{assign_layer_forward.1} parent=1 // pred_check_branch
      %78 = sbr.rel (0) target = $region21
    $region20: #{assign_layer_forward.1} parent=1 // pred_region
      _
    $region21: #{assign_layer_forward.1} parent=1 // pred_fallthru
      _
    // Predicated region
    $region22: #{assign_layer_forward.1} parent=1 // pred_check
      _
    $region23: #{assign_layer_forward.1} parent=1 // pred_check_branch
      %80 = sbr.rel (0) target = $region25
    $region24: #{assign_layer_forward.1} parent=1 // pred_region
      _
    $region25: #{assign_layer_forward.1} parent=1 // pred_fallthru
      _
    // Predicated region
    $region26: #{assign_layer_forward.1} parent=1 // pred_check
      _
    $region27: #{assign_layer_forward.1} parent=1 // pred_check_branch
      %82 = sbr.rel (0) target = $region29
    $region28: #{assign_layer_forward.1} parent=1 // pred_region
      _
    $region29: #{assign_layer_forward.1} parent=1 // pred_fallthru
      _
    // Predicated region
    $region30: #{assign_layer_forward.1} parent=1 // pred_check
      _
    $region31: #{assign_layer_forward.1} parent=1 // pred_check_branch
      %84 = sbr.rel (0) target = $region33
    $region32: #{assign_layer_forward.1} parent=1 // pred_region
      _
    $region33: #{assign_layer_forward.1} parent=1 // pred_fallthru
      _
    // Predicated region
    $region34: #{assign_layer_forward.1} parent=1 // pred_check
      _
    $region35: #{assign_layer_forward.1} parent=1 // pred_check_branch
      %86 = sbr.rel (0) target = $region37
    $region36: #{assign_layer_forward.1} parent=1 // pred_region
      _
    $region37: #{assign_layer_forward.1} parent=1 // pred_fallthru
      _
    // Predicated region
    $region38: #{assign_layer_forward.1} parent=1 // pred_check
      _
    $region39: #{assign_layer_forward.1} parent=1 // pred_check_branch
      %88 = sbr.rel (0) target = $region41
    $region40: #{assign_layer_forward.1} parent=1 // pred_region
      %90 = dma.done [#allocation4], 256
    $region41: #{assign_layer_forward.1} parent=1 // pred_fallthru
      _
    // Predicated region
    $region42: #{assign_layer_forward.1} parent=1 // pred_check
      _
    $region43: #{assign_layer_forward.1} parent=1 // pred_check_branch
      %92 = sbr.rel (0) target = $region45
    $region44: #{assign_layer_forward.1} parent=1 // pred_region
      %94 = dma.done [#allocation7], 256
    $region45: #{assign_layer_forward.1} parent=1 // pred_fallthru
      _
    // Predicated region
    $region46: #{assign_layer_forward.1} parent=1 // pred_check
      _
    $region47: #{assign_layer_forward.1} parent=1 // pred_check_branch
      %96 = sbr.rel (0) target = $region49
    $region48: #{assign_layer_forward.1} parent=1 // pred_region
      %98 = dma.done [#allocation7], 256
    $region49: #{assign_layer_forward.1} parent=1 // pred_fallthru
      _
    // Predicated region
    $region50: #{assign_layer_forward.1} parent=1 // pred_check
      _
    $region51: #{assign_layer_forward.1} parent=1 // pred_check_branch
      %100 = sbr.rel (0) target = $region53
    $region52: #{assign_layer_forward.1} parent=1 // pred_region
      %102 = dma.done [#allocation10], 256
    $region53: #{assign_layer_forward.1} parent=1 // pred_fallthru
      _
    %v103 = vld [vmem:[#allocation3] sm:$0xff]
    %v104 = vld [vmem:[#allocation3 + $0x8] sm:$0xff]
    %vm105 = vcmp.ne.f32.partialorder %v103, 0.0
    %vm106 = vcmp.ne.f32.partialorder %v104, 0.0
    %v107 = vsel %vm105, 1, 0
    %v108 = vsel %vm106, 1, 0
    %v109 = vcvt.s32.f32 %v107
    %v110 = vcvt.s32.f32 %v108
    %v111 = vld [vmem:[#allocation8] sm:$0xff]
    %v112 = vld [vmem:[#allocation8 + $0x8] sm:$0xff]
    %v113 = vld [vmem:[#allocation9] sm:$0xff]
    %v114 = vld [vmem:[#allocation9 + $0x8] sm:$0xff]
    %v115 = vld [vmem:[%s4] sm:$0x1]
    %v117 = vperm.slane %v115, 0
    %vm119 = vcmask 130048
    %v121 = vsel %vm119, %v111, 0
    %v124 = vsel %vm119, %v112, 0
    %v127 = vsel %vm119, %v113, 0
    %v130 = vsel %vm119, %v114, 0
    %132 = vmatpush.xpose.msra.mxu0 0.0
    %133 = vmatpush.xpose.msra.mxu0 0.0
    %134 = vmatpush.xpose.msra.mxu0 0.0
    %135 = vmatpush.xpose.msra.mxu0 0.0
    %136 = vmatpush.xpose.msra.mxu0 0.0
    %137 = vmatpush.xpose.msra.mxu0 0.0
    %138 = vmatpush.xpose.msra.mxu0 0.0
    %139 = vmatpush.xpose.msra.mxu0 0.0
    %140 = vmatpush.xpose.msra.mxu0 0.0
    %141 = vmatpush.xpose.msra.mxu0 0.0
    %142 = vmatpush.xpose.msra.mxu0 0.0
    %143 = vmatpush.xpose.msra.mxu0 0.0
    %144 = vmatpush.xpose.msra.mxu0 0.0
    %145 = vmatpush.xpose.msra.mxu0 0.0
    %146 = vmatpush.xpose.msra.mxu0 %v130
    %147 = vmatpush.xpose.msra.mxu0 %v127
    %148 = vmatmul.f32.gmra.mxu0 %v121
    %v149 = vpop.f32.mrf.mxu0
    %v150 = vadd.f32 %v117, %v149
    %151 = vmatmul.f32.gmra.mxu0 %v124
    %v152 = vpop.f32.mrf.mxu0
    %v153 = vadd.f32 %v117, %v152
    %154 = vdwg.mxu0
    %v155 = vsel %vm119, %v109, 0.0
    %v156 = vsel %vm119, %v110, 0.0
    %v157 = vadd.f32 %v155, %v156
    %v158 = vrot.slane %v157, 4
    %v159 = vadd.f32 %v157, %v158
    %v160 = vrot.slane %v159, 2
    %v161 = vadd.f32 %v159, %v160
    %v162 = vrot.slane %v161, 1
    %v163 = vadd.f32 %v161, %v162
    %vm164 = vcmp.gt.f32.partialorder %v163, 0.0
    %v165 = vrcp.pop %v163
    %v166 = vmul.f32 %v163, %v165
    %v167 = vsub.f32 1.0, %v166
    %v168 = vmul.f32 %v165, %v167
    %v169 = vadd.f32 %v165, %v168
    %vm170 = vweird.f32 %v163
    %vm171 = vweird.f32 %v165
    %vm172 = vmor %vm170, %vm171
    %v173 = vsel %vm172, %v165, %v169
    %v174 = vand.u32 2147483647, %v163
    %vm175 = vcmp.eq.f32.partialorder %v174, 8.507059e+37
    %v176 = vand.u32 %v163, 2147483648
    %v177 = vor.u32 1.1754944e-38, %v176
    %v178 = vsel %vm175, %v177, %v173
    %v179 = vmul.f32 1.0, %v178
    %v180 = vsel %vm164, %v179, 0.0
    %v181 = vmul.f32 %v109, %v180
    %v182 = vmul.f32 %v110, %v180
    %183 = vxpose.xlu0.b32.start [1/16] %v181, 128
    %184 = vxpose.xlu0.b32.cont [2/16] %v182, 128
    %185 = vxpose.xlu0.b32.cont [3/16] 0.0, 128
    %186 = vxpose.xlu0.b32.cont [4/16] 0.0, 128
    %187 = vxpose.xlu0.b32.cont [5/16] 0.0, 128
    %188 = vxpose.xlu0.b32.cont [6/16] 0.0, 128
    %189 = vxpose.xlu0.b32.cont [7/16] 0.0, 128
    %190 = vxpose.xlu0.b32.cont [8/16] 0.0, 128
    %191 = vxpose.xlu0.b32.cont [9/16] 0.0, 128
    %192 = vxpose.xlu0.b32.cont [10/16] 0.0, 128
    %193 = vxpose.xlu0.b32.cont [11/16] 0.0, 128
    %194 = vxpose.xlu0.b32.cont [12/16] 0.0, 128
    %195 = vxpose.xlu0.b32.cont [13/16] 0.0, 128
    %196 = vxpose.xlu0.b32.cont [14/16] 0.0, 128
    %197 = vxpose.xlu0.b32.cont [15/16] 0.0, 128
    %198 = vxpose.xlu0.b32.end [16/16] 0.0, 128
    %v199 = vpop.trf.xlu0
    %v200 = vpop.trf.xlu0
    %v201 = vpop.trf.xlu0
    %v202 = vpop.trf.xlu0
    %v203 = vpop.trf.xlu0
    %v204 = vpop.trf.xlu0
    %v205 = vpop.trf.xlu0
    %v206 = vpop.trf.xlu0
    %v207 = vpop.trf.xlu0
    %v208 = vpop.trf.xlu0
    %v209 = vpop.trf.xlu0
    %v210 = vpop.trf.xlu0
    %v211 = vpop.trf.xlu0
    %v212 = vpop.trf.xlu0
    %v213 = vpop.trf.xlu0
    %v214 = vpop.trf.xlu0
    %v216 = vsel %vm119, %v199, 0
    %v219 = vsel %vm119, %v200, 0
    %221 = vmatpush.msra.mxu0 0.0
    %222 = vmatpush.msra.mxu0 0.0
    %223 = vmatpush.msra.mxu0 0.0
    %224 = vmatpush.msra.mxu0 0.0
    %225 = vmatpush.msra.mxu0 0.0
    %226 = vmatpush.msra.mxu0 0.0
    %227 = vmatpush.msra.mxu0 0.0
    %228 = vmatpush.msra.mxu0 0.0
    %229 = vmatpush.msra.mxu0 0.0
    %230 = vmatpush.msra.mxu0 0.0
    %231 = vmatpush.msra.mxu0 0.0
    %232 = vmatpush.msra.mxu0 0.0
    %233 = vmatpush.msra.mxu0 0.0
    %234 = vmatpush.msra.mxu0 0.0
    %235 = vmatpush.msra.mxu0 %v153
    %236 = vmatpush.msra.mxu0 %v150
    %237 = vmatmul.f32.gmra.mxu0 %v216
    %v238 = vpop.f32.mrf.mxu0
    %v239 = vadd.f32 0.0, %v238
    %240 = vmatmul.f32.gmra.mxu0 %v219
    %v241 = vpop.f32.mrf.mxu0
    %v242 = vadd.f32 0.0, %v241
    %243 = vdwg.mxu0
    %v244 = vmax.f32 %v239, 0.0
    %v245 = vmax.f32 %v242, 0.0
    %v246 = vld [vmem:[%s5] sm:$0xf]
    %v247 = vld [vmem:[%s6] sm:$0x1]
    %v249 = vperm.slane %v247, 0
    %v252 = vsel %vm119, %v244, 0
    %v255 = vsel %vm119, %v245, 0
    %v258 = vsel %vm119, %v246, 0
    %260 = vmatpush.xpose.msra.mxu0 0.0
    %261 = vmatpush.xpose.msra.mxu0 0.0
    %262 = vmatpush.xpose.msra.mxu0 0.0
    %263 = vmatpush.xpose.msra.mxu0 0.0
    %264 = vmatpush.xpose.msra.mxu0 0.0
    %265 = vmatpush.xpose.msra.mxu0 0.0
    %266 = vmatpush.xpose.msra.mxu0 0.0
    %267 = vmatpush.xpose.msra.mxu0 0.0
    %268 = vmatpush.xpose.msra.mxu0 0.0
    %269 = vmatpush.xpose.msra.mxu0 0.0
    %270 = vmatpush.xpose.msra.mxu0 0.0
    %271 = vmatpush.xpose.msra.mxu0 0.0
    %272 = vmatpush.xpose.msra.mxu0 0.0
    %273 = vmatpush.xpose.msra.mxu0 0.0
    %274 = vmatpush.xpose.msra.mxu0 0.0
    %275 = vmatpush.xpose.msra.mxu0 %v258
    %276 = vmatmul.f32.gmra.mxu0 %v252
    %v277 = vpop.f32.mrf.mxu0
    %v278 = vadd.f32 %v249, %v277
    %279 = vmatmul.f32.gmra.mxu0 %v255
    %v280 = vpop.f32.mrf.mxu0
    %v281 = vadd.f32 %v249, %v280
    %282 = vdwg.mxu0
    %v283 = vld [vmem:[%s7] sm:$0x1]
    %v285 = vperm.slane %v283, 0
    %v287 = vmul.f32 %v278, %v285
    %v288 = vmul.f32 %v281, %v285
    %vm289 = vcmask 31744
    %v290 = vsel %vm289, %v287, 0.0
    %291 = vadd.xlane.f32.xlu0 %v290
    %v292 = vpop.xlane.xlu0 %291
    %v293 = vsel %vm289, %v288, 0.0
    %294 = vadd.xlane.f32.xlu0 %v293
    %v295 = vpop.xlane.xlu0 %294
    %296 = vrot.lane.b32.xlu0 %v285, 124
    %v297 = vpop.permute.xlu0 %296
    %v298 = vsel %vm289, %v297, 0
    %v301 = vsel %vm289, %v278, 0
    %v304 = vsel %vm289, %v281, 0
    %306 = vmatpush.xpose.msra.mxu0 0.0
    %307 = vmatpush.xpose.msra.mxu0 0.0
    %308 = vmatpush.xpose.msra.mxu0 0.0
    %309 = vmatpush.xpose.msra.mxu0 0.0
    %310 = vmatpush.xpose.msra.mxu0 0.0
    %311 = vmatpush.xpose.msra.mxu0 0.0
    %312 = vmatpush.xpose.msra.mxu0 0.0
    %313 = vmatpush.xpose.msra.mxu0 0.0
    %314 = vmatpush.xpose.msra.mxu0 0.0
    %315 = vmatpush.xpose.msra.mxu0 0.0
    %316 = vmatpush.xpose.msra.mxu0 0.0
    %317 = vmatpush.xpose.msra.mxu0 0.0
    %318 = vmatpush.xpose.msra.mxu0 0.0
    %319 = vmatpush.xpose.msra.mxu0 0.0
    %320 = vmatpush.xpose.msra.mxu0 %v304
    %321 = vmatpush.xpose.msra.mxu0 %v301
    %322 = vmatmul.f32.gmra.mxu0 %v298
    %v323 = vpop.f32.mrf.mxu0
    %v324 = vadd.f32 0.0, %v323
    %325 = vdwg.mxu0
    %v326 = vperm.slane %v324, 0
    %v327 = vadd.f32 %v292, %v326
    %v328 = vadd.f32 %v295, %v326
    %v329 = vld [vmem:[#allocation2] sm:$0x1]
    %v331 = vperm.slane %v329, 0
    %332 = vset.pattern.permute.xlu0 0
    %333 = vperm.xlu0 %332, %v331
    %v334 = vpop.permute.xlu0 %333
    %v336 = vadd.f32 %v327, %v334
    %v337 = vadd.f32 %v328, %v334
    %vm338 = vcmp.ge.f32.partialorder %v336, 0.0
    %vm339 = vcmp.ge.f32.partialorder %v337, 0.0
    %v340 = vmul.f32 %v336, 0.01
    %v341 = vmul.f32 %v337, 0.01
    %v342 = vsel %vm338, %v336, %v340
    %v343 = vsel %vm339, %v337, %v341
    %v344 = vsel %vm105, %v342, -1e+30
    %v345 = vsel %vm106, %v343, -1e+30
    %v346 = vsel %vm119, %v344, -inf
    %v347 = vsel %vm119, %v345, -inf
    %v348 = vmax.f32 %v346, %v347
    %v349 = vrot.slane %v348, 4
    %v350 = vmax.f32 %v348, %v349
    %v351 = vrot.slane %v350, 2
    %v352 = vmax.f32 %v350, %v351
    %v353 = vrot.slane %v352, 1
    %v354 = vmax.f32 %v352, %v353
    %v355 = vsub.f32 %v344, %v354
    %v356 = vsub.f32 %v345, %v354
    %v357 = vmul.f32 %v355, 1.442695
    %v358 = vpow.pop %v357
    %v359 = vmul.f32 %v356, 1.442695
    %v360 = vpow.pop %v359
    %v361 = vsel %vm105, %v358, 0.0
    %v362 = vsel %vm106, %v360, 0.0
    %v363 = vsel %vm119, %v361, 0.0
    %v364 = vsel %vm119, %v362, 0.0
    %v365 = vadd.f32 %v363, %v364
    %v366 = vrot.slane %v365, 4
    %v367 = vadd.f32 %v365, %v366
    %v368 = vrot.slane %v367, 2
    %v369 = vadd.f32 %v367, %v368
    %v370 = vrot.slane %v369, 1
    %v371 = vadd.f32 %v369, %v370
    %vm372 = vcmp.gt.f32.partialorder %v371, 0.0
    %v373 = vrcp.pop %v371
    %v374 = vmul.f32 %v371, %v373
    %v375 = vsub.f32 1.0, %v374
    %v376 = vmul.f32 %v373, %v375
    %v377 = vadd.f32 %v373, %v376
    %vm378 = vweird.f32 %v371
    %vm379 = vweird.f32 %v373
    %vm380 = vmor %vm378, %vm379
    %v381 = vsel %vm380, %v373, %v377
    %v382 = vand.u32 2147483647, %v371
    %vm383 = vcmp.eq.f32.partialorder %v382, 8.507059e+37
    %v384 = vand.u32 %v371, 2147483648
    %v385 = vor.u32 1.1754944e-38, %v384
    %v386 = vsel %vm383, %v385, %v381
    %v387 = vmul.f32 1.0, %v386
    %v388 = vsel %vm372, %v387, 0.0
    %v389 = vmul.f32 %v361, %v388
    %v390 = vmul.f32 %v362, %v388
    %391 = vxpose.xlu0.b32.start [1/16] %v389, 128
    %392 = vxpose.xlu0.b32.cont [2/16] %v390, 128
    %393 = vxpose.xlu0.b32.cont [3/16] 0.0, 128
    %394 = vxpose.xlu0.b32.cont [4/16] 0.0, 128
    %395 = vxpose.xlu0.b32.cont [5/16] 0.0, 128
    %396 = vxpose.xlu0.b32.cont [6/16] 0.0, 128
    %397 = vxpose.xlu0.b32.cont [7/16] 0.0, 128
    %398 = vxpose.xlu0.b32.cont [8/16] 0.0, 128
    %399 = vxpose.xlu0.b32.cont [9/16] 0.0, 128
    %400 = vxpose.xlu0.b32.cont [10/16] 0.0, 128
    %401 = vxpose.xlu0.b32.cont [11/16] 0.0, 128
    %402 = vxpose.xlu0.b32.cont [12/16] 0.0, 128
    %403 = vxpose.xlu0.b32.cont [13/16] 0.0, 128
    %404 = vxpose.xlu0.b32.cont [14/16] 0.0, 128
    %405 = vxpose.xlu0.b32.cont [15/16] 0.0, 128
    %406 = vxpose.xlu0.b32.end [16/16] 0.0, 128
    %v407 = vpop.trf.xlu0
    %v408 = vpop.trf.xlu0
    %v409 = vpop.trf.xlu0
    %v410 = vpop.trf.xlu0
    %v411 = vpop.trf.xlu0
    %v412 = vpop.trf.xlu0
    %v413 = vpop.trf.xlu0
    %v414 = vpop.trf.xlu0
    %v415 = vpop.trf.xlu0
    %v416 = vpop.trf.xlu0
    %v417 = vpop.trf.xlu0
    %v418 = vpop.trf.xlu0
    %v419 = vpop.trf.xlu0
    %v420 = vpop.trf.xlu0
    %v421 = vpop.trf.xlu0
    %v422 = vpop.trf.xlu0
    %v424 = vsel %vm119, %v407, 0
    %v427 = vsel %vm119, %v408, 0
    %429 = vmatpush.msra.mxu0 0.0
    %430 = vmatpush.msra.mxu0 0.0
    %431 = vmatpush.msra.mxu0 0.0
    %432 = vmatpush.msra.mxu0 0.0
    %433 = vmatpush.msra.mxu0 0.0
    %434 = vmatpush.msra.mxu0 0.0
    %435 = vmatpush.msra.mxu0 0.0
    %436 = vmatpush.msra.mxu0 0.0
    %437 = vmatpush.msra.mxu0 0.0
    %438 = vmatpush.msra.mxu0 0.0
    %439 = vmatpush.msra.mxu0 0.0
    %440 = vmatpush.msra.mxu0 0.0
    %441 = vmatpush.msra.mxu0 0.0
    %442 = vmatpush.msra.mxu0 0.0
    %443 = vmatpush.msra.mxu0 %v281
    %444 = vmatpush.msra.mxu0 %v278
    %445 = vmatmul.f32.gmra.mxu0 %v424
    %v446 = vpop.f32.mrf.mxu0
    %v447 = vadd.f32 0.0, %v446
    %448 = vmatmul.f32.gmra.mxu0 %v427
    %v449 = vpop.f32.mrf.mxu0
    %v450 = vadd.f32 0.0, %v449
    %451 = vdwg.mxu0
    %v452 = vmax.f32 %v447, 0.0
    %v453 = vmax.f32 %v450, 0.0
    %v454 = vsel %vm289, %v452, -inf
    %455 = vmax.xlane.f32.xlu0 %v454
    %v456 = vpop.xlane.xlu0 %455
    %v457 = vsel %vm289, %v453, -inf
    %458 = vmax.xlane.f32.xlu0 %v457
    %v459 = vpop.xlane.xlu0 %458
    %v460 = vsub.f32 %v452, %v456
    %v461 = vsub.f32 %v453, %v459
    %v462 = vmul.f32 %v460, 1.442695
    %v463 = vpow.pop %v462
    %v464 = vmul.f32 %v461, 1.442695
    %v465 = vpow.pop %v464
    %v466 = vsel %vm289, %v463, 0.0
    %467 = vadd.xlane.f32.xlu0 %v466
    %v468 = vpop.xlane.xlu0 %467
    %v469 = vsel %vm289, %v465, 0.0
    %470 = vadd.xlane.f32.xlu0 %v469
    %v471 = vpop.xlane.xlu0 %470
    %v472 = vrcp.pop %v468
    %v473 = vmul.f32 %v468, %v472
    %v474 = vsub.f32 1.0, %v473
    %v475 = vmul.f32 %v472, %v474
    %v476 = vadd.f32 %v472, %v475
    %vm477 = vweird.f32 %v468
    %vm478 = vweird.f32 %v472
    %vm479 = vmor %vm477, %vm478
    %v480 = vsel %vm479, %v472, %v476
    %v481 = vand.u32 2147483647, %v468
    %vm482 = vcmp.eq.f32.partialorder %v481, 8.507059e+37
    %v483 = vand.u32 %v468, 2147483648
    %v484 = vor.u32 1.1754944e-38, %v483
    %v485 = vsel %vm482, %v484, %v480
    %v486 = vmul.f32 %v463, %v485
    %v487 = vrcp.pop %v471
    %v488 = vmul.f32 %v471, %v487
    %v489 = vsub.f32 1.0, %v488
    %v490 = vmul.f32 %v487, %v489
    %v491 = vadd.f32 %v487, %v490
    %vm492 = vweird.f32 %v471
    %vm493 = vweird.f32 %v487
    %vm494 = vmor %vm492, %vm493
    %v495 = vsel %vm494, %v487, %v491
    %v496 = vand.u32 2147483647, %v471
    %vm497 = vcmp.eq.f32.partialorder %v496, 8.507059e+37
    %v498 = vand.u32 %v471, 2147483648
    %v499 = vor.u32 1.1754944e-38, %v498
    %v500 = vsel %vm497, %v499, %v495
    %v501 = vmul.f32 %v465, %v500
    %502 = vxpose.xlu0.b32.start [1/16] %v486, 128
    %503 = vxpose.xlu0.b32.cont [2/16] %v501, 128
    %504 = vxpose.xlu0.b32.cont [3/16] 0.0, 128
    %505 = vxpose.xlu0.b32.cont [4/16] 0.0, 128
    %506 = vxpose.xlu0.b32.cont [5/16] 0.0, 128
    %507 = vxpose.xlu0.b32.cont [6/16] 0.0, 128
    %508 = vxpose.xlu0.b32.cont [7/16] 0.0, 128
    %509 = vxpose.xlu0.b32.cont [8/16] 0.0, 128
    %510 = vxpose.xlu0.b32.cont [9/16] 0.0, 128
    %511 = vxpose.xlu0.b32.cont [10/16] 0.0, 128
    %512 = vxpose.xlu0.b32.cont [11/16] 0.0, 128
    %513 = vxpose.xlu0.b32.cont [12/16] 0.0, 128
    %514 = vxpose.xlu0.b32.cont [13/16] 0.0, 128
    %515 = vxpose.xlu0.b32.cont [14/16] 0.0, 128
    %516 = vxpose.xlu0.b32.cont [15/16] 0.0, 128
    %517 = vxpose.xlu0.b32.end [16/16] 0.0, 128
    %v518 = vpop.trf.xlu0
    %v519 = vpop.trf.xlu0
    %v520 = vpop.trf.xlu0
    %v521 = vpop.trf.xlu0
    %v522 = vpop.trf.xlu0
    %v523 = vpop.trf.xlu0
    %v524 = vpop.trf.xlu0
    %v525 = vpop.trf.xlu0
    %v526 = vpop.trf.xlu0
    %v527 = vpop.trf.xlu0
    %v528 = vpop.trf.xlu0
    %v529 = vpop.trf.xlu0
    %v530 = vpop.trf.xlu0
    %v531 = vpop.trf.xlu0
    %v532 = vpop.trf.xlu0
    %v533 = vpop.trf.xlu0
    %v535 = vsel %vm119, %v518, 0
    %537 = vmatpush.msra.mxu0 0.0
    %538 = vmatpush.msra.mxu0 0.0
    %539 = vmatpush.msra.mxu0 0.0
    %540 = vmatpush.msra.mxu0 0.0
    %541 = vmatpush.msra.mxu0 0.0
    %542 = vmatpush.msra.mxu0 0.0
    %543 = vmatpush.msra.mxu0 0.0
    %544 = vmatpush.msra.mxu0 0.0
    %545 = vmatpush.msra.mxu0 0.0
    %546 = vmatpush.msra.mxu0 0.0
    %547 = vmatpush.msra.mxu0 0.0
    %548 = vmatpush.msra.mxu0 0.0
    %549 = vmatpush.msra.mxu0 0.0
    %550 = vmatpush.msra.mxu0 0.0
    %551 = vmatpush.msra.mxu0 %v245
    %552 = vmatpush.msra.mxu0 %v244
    %553 = vmatmul.f32.gmra.mxu0 %v535
    %v554 = vpop.f32.mrf.mxu0
    %v555 = vadd.f32 0.0, %v554
    %556 = vdwg.mxu0
    %v557 = vld [vmem:[#allocation6] sm:$0xff]
    %v558 = vld [vmem:[#allocation6 + $0x8] sm:$0xff]
    %559 = vmatpush.msra.mxu0 0.0
    %560 = vmatpush.msra.mxu0 0.0
    %561 = vmatpush.msra.mxu0 0.0
    %562 = vmatpush.msra.mxu0 0.0
    %563 = vmatpush.msra.mxu0 0.0
    %564 = vmatpush.msra.mxu0 0.0
    %565 = vmatpush.msra.mxu0 0.0
    %566 = vmatpush.msra.mxu0 0.0
    %567 = vmatpush.msra.mxu0 0.0
    %568 = vmatpush.msra.mxu0 0.0
    %569 = vmatpush.msra.mxu0 0.0
    %570 = vmatpush.msra.mxu0 0.0
    %571 = vmatpush.msra.mxu0 0.0
    %572 = vmatpush.msra.mxu0 0.0
    %573 = vmatpush.msra.mxu0 %v558
    %574 = vmatpush.msra.mxu0 %v557
    %575 = vmatmul.f32.gmra.mxu0 %v535
    %v576 = vpop.f32.mrf.mxu0
    %v577 = vadd.f32 0.0, %v576
    %578 = vdwg.mxu0
    %v580 = vsel %vm119, %v577, 0
    %582 = vmatpush.msra.mxu0 0.0
    %583 = vmatpush.msra.mxu0 0.0
    %584 = vmatpush.msra.mxu0 0.0
    %585 = vmatpush.msra.mxu0 0.0
    %586 = vmatpush.msra.mxu0 0.0
    %587 = vmatpush.msra.mxu0 0.0
    %588 = vmatpush.msra.mxu0 0.0
    %589 = vmatpush.msra.mxu0 0.0
    %590 = vmatpush.msra.mxu0 0.0
    %591 = vmatpush.msra.mxu0 0.0
    %592 = vmatpush.msra.mxu0 0.0
    %593 = vmatpush.msra.mxu0 0.0
    %594 = vmatpush.msra.mxu0 0.0
    %595 = vmatpush.msra.mxu0 0.0
    %596 = vmatpush.msra.mxu0 %v501
    %597 = vmatpush.msra.mxu0 %v486
    %598 = vmatmul.f32.gmra.mxu0 %v580
    %v599 = vpop.f32.mrf.mxu0
    %v600 = vadd.f32 0.0, %v599
    %601 = vdwg.mxu0
    %v602 = vlaneseq
    %v603 = vshrl.u32 %v602, 7
    %v604 = vlaneseq
    %v605 = vand.u32 %v604, 127
    %vm606 = vcmp.eq.s32.totalorder %v603, %v605
    %v607 = vsel %vm606, 0.0, %v600
    %vm608 = vcmp.ne.f32.partialorder %v607, 0.0
    %v609 = vsel %vm608, 1, 0
    %v610 = vcvt.s32.f32 %v609
    %v611 = vsel %vm606, 1.0, %v610
    %612 = vst.msk [vmem:[%s9] sm:$0xff] %vm289, %v486
    %613 = vst.msk [vmem:[%s9 + $0x8] sm:$0xff] %vm289, %v501
    %vm614 = vcmask 125952
    %615 = vst.msk [vmem:[#allocation11] sm:$0xf] %vm614, %v555
    %vm616 = vcmask 27648
    %617 = vst.msk [vmem:[#allocation12] sm:$0xf] %vm616, %v611
    %618 = vst.msk [vmem:[#allocation14] sm:$0xf] %vm616, %v607
    // Predicated region
    $region54: #{assign_layer_forward.1} parent=1 // pred_check
      _
    $region55: #{assign_layer_forward.1} parent=1 // pred_check_branch
      %620 = sbr.rel (0) target = $region57
    $region56: #{assign_layer_forward.1} parent=1 // pred_region
      _
    $region57: #{assign_layer_forward.1} parent=1 // pred_fallthru
      _
    // Predicated region
    $region58: #{assign_layer_forward.1} parent=1 // pred_check
      _
    $region59: #{assign_layer_forward.1} parent=1 // pred_check_branch
      %622 = sbr.rel (0) target = $region61
    $region60: #{assign_layer_forward.1} parent=1 // pred_region
      %624 = vsyncadd [#allocation5], 0
      %s626 = sshll.u32 [#allocation11], 4
      %s627 = int_to_ptr.vmem [resolvable:$true] %s626
      %s628 = sshll.u32 %s10, 4
      %s629 = int_to_ptr.hbm [resolvable:$true] %s628
      %631 = dma.vmem_to_hbm [thread:$0]  %s627, 64, %s629, [#allocation5]
    $region61: #{assign_layer_forward.1} parent=1 // pred_fallthru
      _
    // Predicated region
    $region62: #{assign_layer_forward.1} parent=1 // pred_check
      _
    $region63: #{assign_layer_forward.1} parent=1 // pred_check_branch
      %633 = sbr.rel (0) target = $region65
    $region64: #{assign_layer_forward.1} parent=1 // pred_region
      %635 = vsyncadd [#allocation13], 0
      %s637 = sshll.u32 [#allocation12], 4
      %s638 = int_to_ptr.vmem [resolvable:$true] %s637
      %s639 = sshll.u32 %s11, 4
      %s640 = int_to_ptr.hbm [resolvable:$true] %s639
      %642 = dma.vmem_to_hbm [thread:$0]  %s638, 64, %s640, [#allocation13]
    $region65: #{assign_layer_forward.1} parent=1 // pred_fallthru
      _
    // Predicated region
    $region66: #{assign_layer_forward.1} parent=1 // pred_check
      _
    $region67: #{assign_layer_forward.1} parent=1 // pred_check_branch
      %644 = sbr.rel (0) target = $region69
    $region68: #{assign_layer_forward.1} parent=1 // pred_region
      %646 = vsyncadd [#allocation13], 0
      %s648 = sshll.u32 [#allocation14], 4
      %s649 = int_to_ptr.vmem [resolvable:$true] %s648
      %s650 = sshll.u32 %s12, 4
      %s651 = int_to_ptr.hbm [resolvable:$true] %s650
      %653 = dma.vmem_to_hbm [thread:$0]  %s649, 64, %s651, [#allocation13]
    $region69: #{assign_layer_forward.1} parent=1 // pred_fallthru
      _
    // Predicated region
    $region70: #{assign_layer_forward.1} parent=1 // pred_check
      _
    $region71: #{assign_layer_forward.1} parent=1 // pred_check_branch
      %655 = sbr.rel (0) target = $region73
    $region72: #{assign_layer_forward.1} parent=1 // pred_region
      _
    $region73: #{assign_layer_forward.1} parent=1 // pred_fallthru
      _
    // Predicated region
    $region74: #{assign_layer_forward.1} parent=1 // pred_check
      _
    $region75: #{assign_layer_forward.1} parent=1 // pred_check_branch
      %657 = sbr.rel (0) target = $region77
    $region76: #{assign_layer_forward.1} parent=1 // pred_region
      %659 = dma.done [#allocation5], 64
    $region77: #{assign_layer_forward.1} parent=1 // pred_fallthru
      _
    // Predicated region
    $region78: #{assign_layer_forward.1} parent=1 // pred_check
      _
    $region79: #{assign_layer_forward.1} parent=1 // pred_check_branch
      %661 = sbr.rel (0) target = $region81
    $region80: #{assign_layer_forward.1} parent=1 // pred_region
      %663 = dma.done [#allocation13], 64
    $region81: #{assign_layer_forward.1} parent=1 // pred_fallthru
      _
    // Predicated region
    $region82: #{assign_layer_forward.1} parent=1 // pred_check
      _
    $region83: #{assign_layer_forward.1} parent=1 // pred_check_branch
      %665 = sbr.rel (0) target = $region85
    $region84: #{assign_layer_forward.1} parent=1 // pred_region
      %667 = dma.done [#allocation13], 64
    $region85: #{assign_layer_forward.1} parent=1 // pred_fallthru
      _
    %668 = vsyncpa [#allocation4], 1
    %669 = vsyncpa [#allocation7], 1
    %670 = vsyncpa [#allocation10], 1
    %671 = vsyncpa [#allocation5], 1
    %672 = vsyncpa [#allocation13], 1

</llo_original>
